<compile_context>
chip_gen: v7x
topology: tpu7x:2x2x1
jax: 0.10.0
libtpu: 0.0.40
codegen_flags: <defaults>
</compile_context>

<pallas_src>
import math
from functools import partial

import jax
import jax.numpy as jnp
from jax.experimental import pallas as pl
from jax.experimental.pallas import tpu as pltpu


# ----------------------------- kernel body ----------------------------------

def _conv_relu_kernel(x_ref, w_ref, b_ref, o_ref, *, H_out, KH, dilation):
    """One (image-batch, lane-tile) block per grid step.

    x_ref: (Nb, Hp, Kdim)   bf16, H-padded, row-packed input
    w_ref: (KH, Kdim, TL)   bf16, block-Toeplitz weight (W zero-pad folded in)
    b_ref: (1, TL)          f32, bias tiled over W_out
    o_ref: (Nb, H_out, TL)  output
    """
    Nb = x_ref.shape[0]
    Kdim = x_ref.shape[-1]
    TL = o_ref.shape[-1]
    M = Nb * H_out

    # Accumulator initialized with the broadcast bias (saves a separate VPU pass).
    # Kept <= ~64 KiB by the wrapper's Nb cap so it stays in vregs (no spill).
    acc = jnp.broadcast_to(b_ref[...].astype(jnp.float32).reshape(1, TL), (M, TL))

    # KH shifted row-slab matmuls on the MXU, f32 accumulation.
    # kh outer / all Nb images collapsed into M so the same RHS tap is reused.
    for kh in range(KH):
        h0 = kh * dilation
        lhs = x_ref[:, h0:h0 + H_out, :].reshape(M, Kdim)        # (Nb*H_out, Kdim)
        acc = acc + jnp.dot(lhs, w_ref[kh],
                            preferred_element_type=jnp.float32)

    out = jnp.maximum(acc, 0.0).astype(o_ref.dtype)              # ReLU epilogue
    o_ref[...] = out.reshape(Nb, H_out, TL)                      # lane-dense store


# ----------------------------- tiling helpers --------------------------------

def _padded_cin(Cin, W):
    """Smallest Cin' >= Cin with (W*Cin') % 128 == 0, capped at modest inflation."""
    step = 128 // math.gcd(W, 128)
    cin_p = -(-Cin // step) * step
    if cin_p > max(2 * Cin, Cin + 8):
        return Cin                      # alignment too expensive; keep as-is
    return cin_p


def _pick_lane_tile(lanes, KH, Kdim, budget_bytes=16 << 20):
    """Column-tile the Toeplitz weight so its VMEM block fits under budget
    (keeps total well inside the 32 MiB scoped default / v7x's 64 MiB)."""
    full = KH * Kdim * lanes * 2        # bf16 bytes
    if full <= budget_bytes or lanes % 128 != 0:
        # TODO(synk): also add a K-tile (Kdim) grid axis for configs where even a
        # single 128-lane column of the Toeplitz weight overflows VMEM.
        return lanes
    best = 128
    t = 128
    while t <= lanes:
        if lanes % t == 0 and KH * Kdim * t * 2 <= budget_bytes:
            best = t
        t += 128
    return best


def _pick_images_per_step(N, per_image_bytes, H_out, lane_tile,
                          target_bytes=512 * 1024, acc_budget=64 * 1024):
    nb = max(1, -(-target_bytes // max(per_image_bytes, 1)))     # >= ~0.5 MiB/step
    # keep the live f32 accumulator (Nb*H_out, TL) from spilling vregs
    nb = min(nb, max(1, acc_budget // max(H_out * lane_tile * 4, 1)))
    if N >= 2:
        nb = min(nb, max(1, N // 2))    # keep grid >= 2 steps (v7x: 2 TensorCores)
    return max(1, min(nb, N))


# ----------------------------- parameter prep --------------------------------

def prepare_basic_block_params(weight_oihw, bias, *, input_hw, ksize=3, dilation=1):
    """Build the block-Toeplitz weight & tiled bias ONCE (hoisted off the fwd path).

    Gather-style construction (no scatter):
      Wmat[kh, iw*Cin_p + ci, w*Cout + co] = weight[co, ci, kh, kw]
      with kw = (iw - w + pad) / dilation when integer and in [0, KW); else 0.
    """
    H, W = input_hw
    Cout, Cin, KH, KW = weight_oihw.shape
    assert KH == ksize and KW == ksize
    pad = dilation if ksize > 1 else 0
    W_out = W + 2 * pad - dilation * (KW - 1)
    Cin_p = _padded_cin(Cin, W)

    w_hwio = jnp.transpose(weight_oihw, (2, 3, 1, 0)).astype(jnp.float32)  # (KH,KW,Cin,Cout)
    iw = jnp.arange(W)[:, None]
    wo = jnp.arange(W_out)[None, :]
    d = iw - (wo - pad)                                           # (W, W_out)
    valid = (d >= 0) & (d % dilation == 0) & (d < KW * dilation)
    kw_sel = jnp.clip(jnp.floor_divide(d, dilation), 0, KW - 1)
    band = w_hwio[:, kw_sel]                                      # (KH, W, W_out, Cin, Cout)
    band = band * valid[None, :, :, None, None].astype(band.dtype)
    band = jnp.transpose(band, (0, 1, 3, 2, 4))                   # (KH, W, Cin, W_out, Cout)
    if Cin_p > Cin:
        band = jnp.pad(band, ((0, 0), (0, 0), (0, Cin_p - Cin), (0, 0), (0, 0)))
    w_mat = band.reshape(KH, W * Cin_p, W_out * Cout).astype(jnp.bfloat16)

    # bias tiled over W_out so it broadcasts directly onto the lane-dense output
    b_row = jnp.tile(bias.astype(jnp.float32), W_out).reshape(1, W_out * Cout)
    return {"w_mat": w_mat, "b_row": b_row, "Cin_p": Cin_p,
            "ksize": ksize, "dilation": dilation}


# ----------------------------- forward ---------------------------------------

def basic_block_forward(x_nchw, weight_oihw=None, bias=None, *, ksize=3, dilation=1,
                        params=None, out_dtype=None, images_per_step=None):
    """Pallas implementation of BasicBlock.forward (Conv2d + ReLU), NCHW contract."""
    N, Cin, H, W = x_nchw.shape
    if params is None:
        params = prepare_basic_block_params(weight_oihw, bias, input_hw=(H, W),
                                            ksize=ksize, dilation=dilation)
    w_mat, b_row, Cin_p = params["w_mat"], params["b_row"], params["Cin_p"]
    ksize, dilation = params["ksize"], params["dilation"]
    KH = ksize

    pad = dilation if ksize > 1 else 0
    H_out = H + 2 * pad - dilation * (KH - 1)
    W_out = W + 2 * pad - dilation * (KH - 1)
    Hp = H + 2 * pad
    Kdim = W * Cin_p
    lanes = w_mat.shape[-1]
    Cout = lanes // W_out
    out_dtype = x_nchw.dtype if out_dtype is None else out_dtype

    # ---- tiling choices ------------------------------------------------------
    TL = _pick_lane_tile(lanes, KH, Kdim)
    n_lane_tiles = lanes // TL
    per_image_bytes = Hp * Kdim * 2 + H_out * lanes * jnp.dtype(out_dtype).itemsize
    Nb = images_per_step or _pick_images_per_step(N, per_image_bytes, H_out, TL)
    n_steps = -(-N // Nb)
    Np = n_steps * Nb

    # ---- input prep (tiny glue; TODO(synk): keep activations row-packed
    #      end-to-end in a real pipeline instead of NCHW round trips) ----------
    x_nhwc = jnp.transpose(x_nchw, (0, 2, 3, 1))                  # (N, H, W, Cin)
    if Cin_p > Cin:
        x_nhwc = jnp.pad(x_nhwc, ((0, 0), (0, 0), (0, 0), (0, Cin_p - Cin)))
    x_rows = x_nhwc.reshape(N, H, Kdim)
    x_rows = jnp.pad(x_rows, ((0, 0), (pad, pad), (0, 0)))        # H zero-pad
    if Np > N:
        x_rows = jnp.pad(x_rows, ((0, Np - N), (0, 0), (0, 0)))   # batch pad to Nb multiple
    x_rows = x_rows.astype(jnp.bfloat16)                          # bf16 MXU operands

    kernel = partial(_conv_relu_kernel, H_out=H_out, KH=KH, dilation=dilation)
    weight_resident = (n_lane_tiles == 1)

    def _call(use_single_buffer):
        def _const_spec(shape, idx):
            if use_single_buffer and weight_resident:
                # never re-fetched -> single-buffer to halve its VMEM footprint
                return pl.BlockSpec(shape, idx, pipeline_mode=pl.Buffered(1))
            return pl.BlockSpec(shape, idx)

        grid_spec = pltpu.PrefetchScalarGridSpec(
            num_scalar_prefetch=0,
            # lane tiles OUTER so a large weight tile is not re-DMAed every image step
            grid=(n_lane_tiles, n_steps),
            in_specs=[
                pl.BlockSpec((Nb, Hp, Kdim), lambda j, n: (n, 0, 0)),
                _const_spec((KH, Kdim, TL), lambda j, n: (0, 0, j)),
                _const_spec((1, TL), lambda j, n: (0, j)),
            ],
            out_specs=pl.BlockSpec((Nb, H_out, TL), lambda j, n: (n, 0, j)),
        )
        return pl.pallas_call(
            kernel,
            out_shape=jax.ShapeDtypeStruct((Np, H_out, lanes), out_dtype),
            grid_spec=grid_spec,
            compiler_params=pltpu.CompilerParams(
                dimension_semantics=("parallel", "parallel")),
        )(x_rows, w_mat, b_row)

    try:
        out_rows = _call(True)
    except Exception:
        # pl.Buffered / pipeline_mode unsupported on this jax build -> default buffering
        out_rows = _call(False)

    out_rows = out_rows[:N]
    out = out_rows.reshape(N, H_out, W_out, Cout)                 # row-packed -> NCHW
    return jnp.transpose(out, (0, 3, 1, 2))


# ----------------------------- reference & test ------------------------------

def _reference_forward(x_nchw, weight_oihw, bias, *, ksize=3, dilation=1,
                       operand_dtype=jnp.float32):
    pad = dilation if ksize > 1 else 0
    y = jax.lax.conv_general_dilated(
        x_nchw.astype(operand_dtype), weight_oihw.astype(operand_dtype),
        window_strides=(1, 1),
        padding=((pad, pad), (pad, pad)),
        rhs_dilation=(dilation, dilation),
        dimension_numbers=("NCHW", "OIHW", "NCHW"),
        preferred_element_type=jnp.float32,
    )
    y = y + bias.reshape(1, -1, 1, 1).astype(jnp.float32)
    return jnp.maximum(y, 0.0).astype(x_nchw.dtype)


if __name__ == "__main__":
    # Module config: BasicBlock(in_channels=4, out_channels=8, ksize=3, dilation=1)
    N, Cin, H, W = 2, 4, 16, 16
    Cout, K, dil = 8, 3, 1

    key = jax.random.PRNGKey(0)
    kx, kw, kb = jax.random.split(key, 3)

    x = jax.random.normal(kx, (N, Cin, H, W), dtype=jnp.float32)

    # Deterministic init mimicking PyTorch Conv2d default (kaiming-uniform bounds).
    fan_in = Cin * K * K
    bound = 1.0 / math.sqrt(fan_in)
    weight = jax.random.uniform(kw, (Cout, Cin, K, K), jnp.float32,
                                minval=-bound, maxval=bound)
    bias = jax.random.uniform(kb, (Cout,), jnp.float32,
                              minval=-bound, maxval=bound)

    # Toeplitz weight build hoisted off the per-call path (do this once at init).
    params = prepare_basic_block_params(weight, bias, input_hw=(H, W),
                                        ksize=K, dilation=dil)

    out = basic_block_forward(x, params=params)
    out = jax.block_until_ready(out)
    assert out.shape == (N, Cout, H, W)

    # Match-precision check (reference also uses bf16 operands, f32 accumulation).
    ref_bf16 = _reference_forward(x, weight, bias, ksize=K, dilation=dil,
                                  operand_dtype=jnp.bfloat16)
    assert jnp.max(jnp.abs(out - ref_bf16)) < 2e-3

    # Sanity check against full-f32 reference (allowing bf16 operand rounding).
    ref_f32 = _reference_forward(x, weight, bias, ksize=K, dilation=dil,
                                 operand_dtype=jnp.float32)
    assert jnp.max(jnp.abs(out - ref_f32)) < 5e-2

    print("KERNEL_OK")
</pallas_src>

<mosaic_0001>
module attributes {stable_mosaic.version = 11 : i64} {
  func.func @_conv_relu_kernel(%arg0: i32, %arg1: i32, %arg2: memref<1x18x128xbf16, #tpu.memory_space<vmem>>, %arg3: memref<3x128x128xbf16, #tpu.memory_space<vmem>>, %arg4: memref<1x128xf32, #tpu.memory_space<vmem>>, %arg5: memref<1x16x128xf32, #tpu.memory_space<vmem>>) attributes {dimension_semantics = [#tpu.dimension_semantics<parallel>, #tpu.dimension_semantics<parallel>], iteration_bounds = array<i64: 1, 2>, scalar_prefetch = 0 : i64, scratch_operands = 0 : i64, tpu.core_type = #tpu.core_type<tc>, window_params = [{transform_indices = @transform_0, window_bounds = array<i64: 1, 18, 128>}, {pipeline_mode = #tpu.pipeline_mode<synchronous>, transform_indices = @transform_1, window_bounds = array<i64: 3, 128, 128>}, {pipeline_mode = #tpu.pipeline_mode<synchronous>, transform_indices = @transform_2, window_bounds = array<i64: 1, 128>}, {transform_indices = @transform_3, window_bounds = array<i64: 1, 16, 128>}]} {
    %c0 = arith.constant 0 : index
    %c0_0 = arith.constant 0 : index
    %0 = vector.load %arg4[%c0, %c0_0] : memref<1x128xf32, #tpu.memory_space<vmem>>, vector<1x128xf32>
    %1 = vector.shape_cast %0 : vector<1x128xf32> to vector<1x128xf32>
    %2 = vector.broadcast %1 : vector<1x128xf32> to vector<16x128xf32>
    %c0_1 = arith.constant 0 : index
    %c0_2 = arith.constant 0 : index
    %c0_3 = arith.constant 0 : index
    %3 = vector.load %arg2[%c0_1, %c0_2, %c0_3] : memref<1x18x128xbf16, #tpu.memory_space<vmem>>, vector<1x16x128xbf16>
    %4 = vector.shape_cast %3 : vector<1x16x128xbf16> to vector<16x128xbf16>
    %c0_4 = arith.constant 0 : index
    %c0_5 = arith.constant 0 : index
    %c0_6 = arith.constant 0 : index
    %5 = vector.load %arg3[%c0_4, %c0_5, %c0_6] : memref<3x128x128xbf16, #tpu.memory_space<vmem>>, vector<1x128x128xbf16>
    %6 = vector.shape_cast %5 : vector<1x128x128xbf16> to vector<128x128xbf16>
    %cst = arith.constant dense<0.000000e+00> : vector<16x128xf32>
    %7 = tpu.matmul %4, %6, %cst {dimension_numbers = #tpu.dot_dimension_numbers<[1], [0], [0], [1], [0, 0, 1, 1], [], []>} : vector<16x128xbf16>, vector<128x128xbf16>, vector<16x128xf32> -> vector<16x128xf32>
    %8 = arith.addf %2, %7 : vector<16x128xf32>
    %c0_7 = arith.constant 0 : index
    %c1 = arith.constant 1 : index
    %c0_8 = arith.constant 0 : index
    %9 = vector.load %arg2[%c0_7, %c1, %c0_8] : memref<1x18x128xbf16, #tpu.memory_space<vmem>>, vector<1x16x128xbf16>
    %10 = vector.shape_cast %9 : vector<1x16x128xbf16> to vector<16x128xbf16>
    %c1_9 = arith.constant 1 : index
    %c0_10 = arith.constant 0 : index
    %c0_11 = arith.constant 0 : index
    %11 = vector.load %arg3[%c1_9, %c0_10, %c0_11] : memref<3x128x128xbf16, #tpu.memory_space<vmem>>, vector<1x128x128xbf16>
    %12 = vector.shape_cast %11 : vector<1x128x128xbf16> to vector<128x128xbf16>
    %cst_12 = arith.constant dense<0.000000e+00> : vector<16x128xf32>
    %13 = tpu.matmul %10, %12, %cst_12 {dimension_numbers = #tpu.dot_dimension_numbers<[1], [0], [0], [1], [0, 0, 1, 1], [], []>} : vector<16x128xbf16>, vector<128x128xbf16>, vector<16x128xf32> -> vector<16x128xf32>
    %14 = arith.addf %8, %13 : vector<16x128xf32>
    %c0_13 = arith.constant 0 : index
    %c2 = arith.constant 2 : index
    %c0_14 = arith.constant 0 : index
    %15 = vector.load %arg2[%c0_13, %c2, %c0_14] : memref<1x18x128xbf16, #tpu.memory_space<vmem>>, vector<1x16x128xbf16>
    %16 = vector.shape_cast %15 : vector<1x16x128xbf16> to vector<16x128xbf16>
    %c2_15 = arith.constant 2 : index
    %c0_16 = arith.constant 0 : index
    %c0_17 = arith.constant 0 : index
    %17 = vector.load %arg3[%c2_15, %c0_16, %c0_17] : memref<3x128x128xbf16, #tpu.memory_space<vmem>>, vector<1x128x128xbf16>
    %18 = vector.shape_cast %17 : vector<1x128x128xbf16> to vector<128x128xbf16>
    %cst_18 = arith.constant dense<0.000000e+00> : vector<16x128xf32>
    %19 = tpu.matmul %16, %18, %cst_18 {dimension_numbers = #tpu.dot_dimension_numbers<[1], [0], [0], [1], [0, 0, 1, 1], [], []>} : vector<16x128xbf16>, vector<128x128xbf16>, vector<16x128xf32> -> vector<16x128xf32>
    %20 = arith.addf %14, %19 : vector<16x128xf32>
    %cst_19 = arith.constant 0.000000e+00 : f32
    %21 = vector.broadcast %cst_19 : f32 to vector<16x128xf32>
    %22 = arith.maximumf %20, %21 : vector<16x128xf32>
    %23 = vector.shape_cast %22 : vector<16x128xf32> to vector<1x16x128xf32>
    %c0_20 = arith.constant 0 : index
    %c0_21 = arith.constant 0 : index
    %c0_22 = arith.constant 0 : index
    %24 = vector.load %arg5[%c0_20, %c0_21, %c0_22] : memref<1x16x128xf32, #tpu.memory_space<vmem>>, vector<1x16x128xf32>
    tpu.vector_store %arg5[%c0_20, %c0_21, %c0_22], %23 {strides = array<i32>} : memref<1x16x128xf32, #tpu.memory_space<vmem>>, vector<1x16x128xf32>,
    return
  }
  func.func @transform_0(%arg0: i32, %arg1: i32) -> (i32, i32, i32) {
    %c0_i32 = arith.constant 0 : i32
    %c0_i32_0 = arith.constant 0 : i32
    %c0_i32_1 = arith.constant 0 : i32
    return %arg1, %c0_i32, %c0_i32_0 : i32, i32, i32
  }
  func.func @transform_1(%arg0: i32, %arg1: i32) -> (i32, i32, i32) {
    %c0_i32 = arith.constant 0 : i32
    %c0_i32_0 = arith.constant 0 : i32
    %c0_i32_1 = arith.constant 0 : i32
    return %c0_i32, %c0_i32_0, %arg0 : i32, i32, i32
  }
  func.func @transform_2(%arg0: i32, %arg1: i32) -> (i32, i32) {
    %c0_i32 = arith.constant 0 : i32
    %c0_i32_0 = arith.constant 0 : i32
    return %c0_i32, %arg0 : i32, i32
  }
  func.func @transform_3(%arg0: i32, %arg1: i32) -> (i32, i32, i32) {
    %c0_i32 = arith.constant 0 : i32
    %c0_i32_0 = arith.constant 0 : i32
    return %arg1, %c0_i32, %arg0 : i32, i32, i32
  }
}

module attributes {stable_mosaic.version = 11 : i64} {
  func.func @_conv_relu_kernel(%arg0: i32, %arg1: i32, %arg2: memref<1x18x128xbf16, #tpu.memory_space<vmem>>, %arg3: memref<3x128x128xbf16, #tpu.memory_space<vmem>>, %arg4: memref<1x128xf32, #tpu.memory_space<vmem>>, %arg5: memref<1x16x128xf32, #tpu.memory_space<vmem>>) attributes {dimension_semantics = [#tpu.dimension_semantics<parallel>, #tpu.dimension_semantics<parallel>], iteration_bounds = array<i64: 1, 2>, scalar_prefetch = 0 : i64, scratch_operands = 0 : i64, tpu.core_type = #tpu.core_type<tc>, window_params = [{transform_indices = @transform_0, window_bounds = array<i64: 1, 18, 128>}, {transform_indices = @transform_1, window_bounds = array<i64: 3, 128, 128>}, {transform_indices = @transform_2, window_bounds = array<i64: 1, 128>}, {transform_indices = @transform_3, window_bounds = array<i64: 1, 16, 128>}]} {
    %c0 = arith.constant 0 : index
    %c0_0 = arith.constant 0 : index
    %0 = vector.load %arg4[%c0, %c0_0] : memref<1x128xf32, #tpu.memory_space<vmem>>, vector<1x128xf32>
    %1 = vector.shape_cast %0 : vector<1x128xf32> to vector<1x128xf32>
    %2 = vector.broadcast %1 : vector<1x128xf32> to vector<16x128xf32>
    %c0_1 = arith.constant 0 : index
    %c0_2 = arith.constant 0 : index
    %c0_3 = arith.constant 0 : index
    %3 = vector.load %arg2[%c0_1, %c0_2, %c0_3] : memref<1x18x128xbf16, #tpu.memory_space<vmem>>, vector<1x16x128xbf16>
    %4 = vector.shape_cast %3 : vector<1x16x128xbf16> to vector<16x128xbf16>
    %c0_4 = arith.constant 0 : index
    %c0_5 = arith.constant 0 : index
    %c0_6 = arith.constant 0 : index
    %5 = vector.load %arg3[%c0_4, %c0_5, %c0_6] : memref<3x128x128xbf16, #tpu.memory_space<vmem>>, vector<1x128x128xbf16>
    %6 = vector.shape_cast %5 : vector<1x128x128xbf16> to vector<128x128xbf16>
    %cst = arith.constant dense<0.000000e+00> : vector<16x128xf32>
    %7 = tpu.matmul %4, %6, %cst {dimension_numbers = #tpu.dot_dimension_numbers<[1], [0], [0], [1], [0, 0, 1, 1], [], []>} : vector<16x128xbf16>, vector<128x128xbf16>, vector<16x128xf32> -> vector<16x128xf32>
    %8 = arith.addf %2, %7 : vector<16x128xf32>
    %c0_7 = arith.constant 0 : index
    %c1 = arith.constant 1 : index
    %c0_8 = arith.constant 0 : index
    %9 = vector.load %arg2[%c0_7, %c1, %c0_8] : memref<1x18x128xbf16, #tpu.memory_space<vmem>>, vector<1x16x128xbf16>
    %10 = vector.shape_cast %9 : vector<1x16x128xbf16> to vector<16x128xbf16>
    %c1_9 = arith.constant 1 : index
    %c0_10 = arith.constant 0 : index
    %c0_11 = arith.constant 0 : index
    %11 = vector.load %arg3[%c1_9, %c0_10, %c0_11] : memref<3x128x128xbf16, #tpu.memory_space<vmem>>, vector<1x128x128xbf16>
    %12 = vector.shape_cast %11 : vector<1x128x128xbf16> to vector<128x128xbf16>
    %cst_12 = arith.constant dense<0.000000e+00> : vector<16x128xf32>
    %13 = tpu.matmul %10, %12, %cst_12 {dimension_numbers = #tpu.dot_dimension_numbers<[1], [0], [0], [1], [0, 0, 1, 1], [], []>} : vector<16x128xbf16>, vector<128x128xbf16>, vector<16x128xf32> -> vector<16x128xf32>
    %14 = arith.addf %8, %13 : vector<16x128xf32>
    %c0_13 = arith.constant 0 : index
    %c2 = arith.constant 2 : index
    %c0_14 = arith.constant 0 : index
    %15 = vector.load %arg2[%c0_13, %c2, %c0_14] : memref<1x18x128xbf16, #tpu.memory_space<vmem>>, vector<1x16x128xbf16>
    %16 = vector.shape_cast %15 : vector<1x16x128xbf16> to vector<16x128xbf16>
    %c2_15 = arith.constant 2 : index
    %c0_16 = arith.constant 0 : index
    %c0_17 = arith.constant 0 : index
    %17 = vector.load %arg3[%c2_15, %c0_16, %c0_17] : memref<3x128x128xbf16, #tpu.memory_space<vmem>>, vector<1x128x128xbf16>
    %18 = vector.shape_cast %17 : vector<1x128x128xbf16> to vector<128x128xbf16>
    %cst_18 = arith.constant dense<0.000000e+00> : vector<16x128xf32>
    %19 = tpu.matmul %16, %18, %cst_18 {dimension_numbers = #tpu.dot_dimension_numbers<[1], [0], [0], [1], [0, 0, 1, 1], [], []>} : vector<16x128xbf16>, vector<128x128xbf16>, vector<16x128xf32> -> vector<16x128xf32>
    %20 = arith.addf %14, %19 : vector<16x128xf32>
    %cst_19 = arith.constant 0.000000e+00 : f32
    %21 = vector.broadcast %cst_19 : f32 to vector<16x128xf32>
    %22 = arith.maximumf %20, %21 : vector<16x128xf32>
    %23 = vector.shape_cast %22 : vector<16x128xf32> to vector<1x16x128xf32>
    %c0_20 = arith.constant 0 : index
    %c0_21 = arith.constant 0 : index
    %c0_22 = arith.constant 0 : index
    %24 = vector.load %arg5[%c0_20, %c0_21, %c0_22] : memref<1x16x128xf32, #tpu.memory_space<vmem>>, vector<1x16x128xf32>
    tpu.vector_store %arg5[%c0_20, %c0_21, %c0_22], %23 {strides = array<i32>} : memref<1x16x128xf32, #tpu.memory_space<vmem>>, vector<1x16x128xf32>,
    return
  }
  func.func @transform_0(%arg0: i32, %arg1: i32) -> (i32, i32, i32) {
    %c0_i32 = arith.constant 0 : i32
    %c0_i32_0 = arith.constant 0 : i32
    %c0_i32_1 = arith.constant 0 : i32
    return %arg1, %c0_i32, %c0_i32_0 : i32, i32, i32
  }
  func.func @transform_1(%arg0: i32, %arg1: i32) -> (i32, i32, i32) {
    %c0_i32 = arith.constant 0 : i32
    %c0_i32_0 = arith.constant 0 : i32
    %c0_i32_1 = arith.constant 0 : i32
    return %c0_i32, %c0_i32_0, %arg0 : i32, i32, i32
  }
  func.func @transform_2(%arg0: i32, %arg1: i32) -> (i32, i32) {
    %c0_i32 = arith.constant 0 : i32
    %c0_i32_0 = arith.constant 0 : i32
    return %c0_i32, %arg0 : i32, i32
  }
  func.func @transform_3(%arg0: i32, %arg1: i32) -> (i32, i32, i32) {
    %c0_i32 = arith.constant 0 : i32
    %c0_i32_0 = arith.constant 0 : i32
    return %arg1, %c0_i32, %arg0 : i32, i32, i32
  }
}

</mosaic_0001>

<llo_original>
// kernel: tpu_custom_call.1
$region0: #{tpu_custom_call.1}
  #allocation0 [shape = 'u32[]', space=smem, size = 0x4, offset = 0x4, fixed_abs, tag = 'smem constant byte address 0x4 - core index']
  #allocation1 [shape = 'u32[144,128]{1,0:T(1,128)}', space=vmem, size = 0x12000, scoped, tag = 'internal scratch']
  %s0 = inlined_call_operand.vmem [shape: bf16[2,18,128], index: 0, kind: input, shape index: {}]
  %s1 = inlined_call_operand.hbm [shape: bf16[3,128,128], index: 1, kind: input, shape index: {}]
  %s2 = inlined_call_operand.vmem [shape: f32[1,128], index: 2, kind: input, shape index: {}]
  %s3 = inlined_call_operand.hbm [shape: f32[2,16,128], index: 3, kind: output, shape index: {}]
  %s4 = sld [smem:[#allocation0]]
  $region49: #{tpu_custom_call.1} parent=0
    _
  %s6 = ssub.s32 1, %s4
  %s7 = scalar_select 0, %s6, %s4
  $region1: #{tpu_custom_call.1} parent=0
    #allocation2 [shape = 'u8[98304]{0}', space=vmem, size = 0x18000, scoped, tag = 'input window, operand 1, single buffered']
    #allocation3 [shape = 's32[2]{0}', space=sflag, size = 0x8, scoped, tag = 'scoped memory for tpu_custom_call.1']
    #allocation4 [shape = 's32[2]{0}', space=sflag, size = 0x8, scoped, tag = 'scoped memory for tpu_custom_call.1']
    #allocation5 [shape = 'u8[16384]{0}', space=vmem, size = 0x4000, scoped, tag = 'output window, operand 0']
    %8 = vsyncpa [#allocation3], 0
    %9 = vsyncpa [#allocation4], 0
    %s10 = scalar_lea.sflag [#allocation4], 1
    %11 = vsyncpa %s10, 0
    loop: start=0, step=1, limit=4
    $region2: #{tpu_custom_call.1} parent=1 // loop_pre_header
      _
    $region3: #{tpu_custom_call.1} parent=1 // loop_header
      %s13 = sphi 0, %s17
      %p14 = scmp.ge.s32.totalorder %s13, 4
      %s20 = sphi 0, %s32
      %s21 = sphi 0, %s28
      %s22 = sphi 0, %s20
      %s23 = sphi 0, %s21
      %s24 = sphi 0, %s22
      %s25 = sphi 0, %s23
      %s35 = sphi 0, %s37
      %s38 = sphi 0, %s35
      %s39 = sphi 0, %s38
      %s55 = sphi 0, %s39
      %s61 = sphi 0, %s63
      %s64 = sphi 0, %s61
      %s65 = sphi 0, %s64
      %s81 = sphi 0, %s65
      %s87 = sphi 0, %s89
      %s90 = sphi 0, %s87
      %s91 = sphi 0, %s90
      %s107 = sphi 0, %s91
      %s115 = sphi 0, %s117
      %s118 = sphi 0, %s115
      %s119 = sphi 0, %s118
      %s135 = sphi 0, %s119
    $region4: #{tpu_custom_call.1} parent=1 // loop_header_branch
      %16 = sbr.rel (%p14) target = $region8
    $region5: #{tpu_custom_call.1} parent=1 // loop_body
      %s18 = ssub.s32 %s13, 1
      %s19 = ssub.s32 %s13, 2
      %s26 = sadd.s32 1, %s21
      %p27 = scmp.ge.s32.totalorder %s26, 2
      %s28 = scalar_select %p27, 0, %s26
      %s29 = sadd.s32 1, %s20
      %s30 = scalar_select %p27, %s29, %s20
      %p31 = scmp.ge.s32.totalorder %s30, 1
      %s32 = scalar_select %p31, 0, %s30
      %s33 = ssub.s32 %s21, %s28
      %p34 = scmp.eq.s32.totalorder %s33, 0
      %s36 = sadd.s32 %s35, 1
      %s37 = scalar_select %p34, %s35, %s36
      %p40 = pneg %p34
      %p41 = scmp.eq.s32.totalorder %s13, 1
      %p42 = por %p40, %p41
      %p43 = scmp.ne.s32.totalorder %s35, %s38
      %p44 = scmp.eq.s32.totalorder %s13, 0
      %p45 = por %p43, %p44
      %p46 = scmp.ne.s32.totalorder %s35, %s38
      %p47 = scmp.eq.s32.totalorder %s18, 1
      %p48 = por %p46, %p47
      %p49 = scmp.ne.s32.totalorder %s38, %s39
      %p50 = scmp.eq.s32.totalorder %s18, 0
      %p51 = por %p49, %p50
      %p52 = scmp.ne.s32.totalorder %s38, %s39
      %p53 = scmp.eq.s32.totalorder %s19, 1
      %p54 = por %p52, %p53
      %p56 = scmp.ne.s32.totalorder %s39, %s55
      %p57 = scmp.eq.s32.totalorder %s19, 0
      %p58 = por %p56, %p57
      %s59 = ssub.s32 %s20, %s32
      %p60 = scmp.eq.s32.totalorder %s59, 0
      %s62 = sadd.s32 %s61, 1
      %s63 = scalar_select %p60, %s61, %s62
      %p66 = pneg %p60
      %p67 = scmp.eq.s32.totalorder %s13, 1
      %p68 = por %p66, %p67
      %p69 = scmp.ne.s32.totalorder %s61, %s64
      %p70 = scmp.eq.s32.totalorder %s13, 0
      %p71 = por %p69, %p70
      %p72 = scmp.ne.s32.totalorder %s61, %s64
      %p73 = scmp.eq.s32.totalorder %s18, 1
      %p74 = por %p72, %p73
      %p75 = scmp.ne.s32.totalorder %s64, %s65
      %p76 = scmp.eq.s32.totalorder %s18, 0
      %p77 = por %p75, %p76
      %p78 = scmp.ne.s32.totalorder %s64, %s65
      %p79 = scmp.eq.s32.totalorder %s19, 1
      %p80 = por %p78, %p79
      %p82 = scmp.ne.s32.totalorder %s65, %s81
      %p83 = scmp.eq.s32.totalorder %s19, 0
      %p84 = por %p82, %p83
      %s85 = ssub.s32 %s20, %s32
      %p86 = scmp.eq.s32.totalorder %s85, 0
      %s88 = sadd.s32 %s87, 1
      %s89 = scalar_select %p86, %s87, %s88
      %p92 = pneg %p86
      %p93 = scmp.eq.s32.totalorder %s13, 1
      %p94 = por %p92, %p93
      %p95 = scmp.ne.s32.totalorder %s87, %s90
      %p96 = scmp.eq.s32.totalorder %s13, 0
      %p97 = por %p95, %p96
      %p98 = scmp.ne.s32.totalorder %s87, %s90
      %p99 = scmp.eq.s32.totalorder %s18, 1
      %p100 = por %p98, %p99
      %p101 = scmp.ne.s32.totalorder %s90, %s91
      %p102 = scmp.eq.s32.totalorder %s18, 0
      %p103 = por %p101, %p102
      %p104 = scmp.ne.s32.totalorder %s90, %s91
      %p105 = scmp.eq.s32.totalorder %s19, 1
      %p106 = por %p104, %p105
      %p108 = scmp.ne.s32.totalorder %s91, %s107
      %p109 = scmp.eq.s32.totalorder %s19, 0
      %p110 = por %p108, %p109
      %s111 = ssub.s32 %s21, %s28
      %s112 = ssub.s32 %s20, %s32
      %s113 = sor.u32 %s111, %s112
      %p114 = scmp.eq.s32.totalorder %s113, 0
      %s116 = sadd.s32 %s115, 1
      %s117 = scalar_select %p114, %s115, %s116
      %p120 = pneg %p114
      %p121 = scmp.eq.s32.totalorder %s13, 1
      %p122 = por %p120, %p121
      %p123 = scmp.ne.s32.totalorder %s115, %s118
      %p124 = scmp.eq.s32.totalorder %s13, 0
      %p125 = por %p123, %p124
      %p126 = scmp.ne.s32.totalorder %s115, %s118
      %p127 = scmp.eq.s32.totalorder %s18, 1
      %p128 = por %p126, %p127
      %p129 = scmp.ne.s32.totalorder %s118, %s119
      %p130 = scmp.eq.s32.totalorder %s18, 0
      %p131 = por %p129, %p130
      %p132 = scmp.ne.s32.totalorder %s118, %s119
      %p133 = scmp.eq.s32.totalorder %s19, 1
      %p134 = por %p132, %p133
      %p136 = scmp.ne.s32.totalorder %s119, %s135
      %p137 = scmp.eq.s32.totalorder %s19, 0
      %p138 = por %p136, %p137
      %p139 = scmp.le.s32.totalorder 1, %s13
      %p140 = scmp.lt.s32.totalorder %s13, 3
      %p141 = pnand %p139, %p140
      %p142 = pneg %p141
      // Predicated region
      $region9: #{tpu_custom_call.1} parent=5 // pred_check
        _
      $region10: #{tpu_custom_call.1} parent=5 // pred_check_branch
        %144 = sbr.rel (%p141) target = $region12
      $region11: #{tpu_custom_call.1} parent=5 // pred_region
        %s145 = ssub.s32 %s13, 1
        // Predicated region
        $region13: #{tpu_custom_call.1} parent=11 // pred_check
          %p146 = pneg %p77
        $region14: #{tpu_custom_call.1} parent=11 // pred_check_branch
          %148 = sbr.rel (%p146) target = $region16
        $region15: #{tpu_custom_call.1} parent=11 // pred_region
          %s150 = ssub.s32 3072, 3072
          %151 = vsyncadd [#allocation3], %s150
          %s152 = smul.addr %s22, 64
          %s153 = scalar_lea.hbm %s1, %s152
          %s154 = sshll.u32 [#allocation2], 4
          %s155 = int_to_ptr.vmem [resolvable:$true] %s154
          %160 = dma.hbm_to_vmem [thread:$0]  %s153, 3072, %s155, [#allocation3], 64, 64, 4
        $region16: #{tpu_custom_call.1} parent=11 // pred_fallthru
          _
        // Predicated region
        $region17: #{tpu_custom_call.1} parent=11 // pred_check
          %p161 = pneg %p103
        $region18: #{tpu_custom_call.1} parent=11 // pred_check_branch
          %163 = sbr.rel (%p161) target = $region20
        $region19: #{tpu_custom_call.1} parent=11 // pred_region
          %p164 = scmp.lt.s32.totalorder %s22, 0
          %s165 = scalar_select %p164, %s22, 0
          %s166 = scalar_lea.vmem %s2, %s165
        $region20: #{tpu_custom_call.1} parent=11 // pred_fallthru
          _
      $region12: #{tpu_custom_call.1} parent=5 // pred_fallthru
        _
      %p167 = scmp.lt.s32.totalorder %s13, 2
      // Predicated region
      $region21: #{tpu_custom_call.1} parent=5 // pred_check
        %p168 = pneg %p167
      $region22: #{tpu_custom_call.1} parent=5 // pred_check_branch
        %170 = sbr.rel (%p168) target = $region24
      $region23: #{tpu_custom_call.1} parent=5 // pred_region
        // Predicated region
        $region25: #{tpu_custom_call.1} parent=23 // pred_check
          %p171 = pneg %p45
        $region26: #{tpu_custom_call.1} parent=23 // pred_check_branch
          %173 = sbr.rel (%p171) target = $region28
        $region27: #{tpu_custom_call.1} parent=23 // pred_region
          %p174 = scmp.lt.s32.totalorder %s21, 1
          %s175 = scalar_select %p174, %s21, 1
          %s176 = smul.addr %s175, 3
          %s177 = smul.addr %s176, 4
          %s178 = scalar_lea.vmem %s0, %s177
        $region28: #{tpu_custom_call.1} parent=23 // pred_fallthru
          _
      $region24: #{tpu_custom_call.1} parent=5 // pred_fallthru
        _
      %p179 = scmp.le.s32.totalorder 1, %s13
      %p180 = scmp.lt.s32.totalorder %s13, 3
      %p181 = pnand %p179, %p180
      %p182 = pneg %p181
      // Predicated region
      $region29: #{tpu_custom_call.1} parent=5 // pred_check
        _
      $region30: #{tpu_custom_call.1} parent=5 // pred_check_branch
        %184 = sbr.rel (%p181) target = $region32
      $region31: #{tpu_custom_call.1} parent=5 // pred_region
        %s185 = ssub.s32 %s13, 1
        // Predicated region
        $region33: #{tpu_custom_call.1} parent=31 // pred_check
          %p186 = pneg %p77
        $region34: #{tpu_custom_call.1} parent=31 // pred_check_branch
          %188 = sbr.rel (%p186) target = $region36
        $region35: #{tpu_custom_call.1} parent=31 // pred_region
          %189 = dma.done [#allocation3], 3072
        $region36: #{tpu_custom_call.1} parent=31 // pred_fallthru
          _
        %p190 = scmp.lt.s32.totalorder %s23, 1
        %s191 = scalar_select %p190, %s23, 1
        %s192 = smul.addr %s191, 3
        %s193 = smul.addr %s192, 4
        %s194 = scalar_lea.vmem %s0, %s193
        %p195 = pneg %p51
        %p196 = pneg %p48
        %p197 = pneg %p77
        %p198 = pneg %p74
        %p199 = scmp.lt.s32.totalorder %s22, 0
        %s200 = scalar_select %p199, %s22, 0
        %s201 = scalar_lea.vmem %s2, %s200
        %p202 = pneg %p103
        %p203 = pneg %p100
        %p204 = pneg %p131
        %p205 = pneg %p128
        %s206 = sand.u32 %s118, 1
        %s207 = scalar_lea.sflag [#allocation4], %s206
        %s208 = sand.u32 %s118, 1
        %s209 = smul.addr %s208, 16
        %s210 = scalar_lea.vmem [#allocation5], %s209
        %p211 = scmp.lt.s32.totalorder %s23, 1
        %s212 = scalar_select %p211, %s23, 1
        %s213 = smul.addr %s212, 3
        %s214 = smul.addr %s213, 4
        %s215 = scalar_lea.vmem %s0, %s214
        %p216 = scmp.lt.s32.totalorder %s22, 0
        %s217 = scalar_select %p216, %s22, 0
        %s218 = scalar_lea.vmem %s2, %s217
        %v220 = vld [vmem:[%s218] sm:$0x1]
        %v222 = vlaneseq
        %v223 = vshrl.u32 %v222, 7
        %v224 = vsub.s32 0, %v223
        %v225 = vrot.slane %v220, %v224
        %v227 = vld [vmem:[%s215] sm:$0xf]
        %v228 = vld [vmem:[%s215 + $0x4] sm:$0xf]
        %v229 = vld [vmem:[#allocation2] sm:$0xf]
        %v230 = vld [vmem:[#allocation2 + $0x4] sm:$0xf]
        %v231 = vld [vmem:[#allocation2 + $0x8] sm:$0xf]
        %v232 = vld [vmem:[#allocation2 + $0xc] sm:$0xf]
        %v233 = vld [vmem:[#allocation2 + $0x10] sm:$0xf]
        %v234 = vld [vmem:[#allocation2 + $0x14] sm:$0xf]
        %v235 = vld [vmem:[#allocation2 + $0x18] sm:$0xf]
        %v236 = vld [vmem:[#allocation2 + $0x1c] sm:$0xf]
        %v237 = vld [vmem:[#allocation2 + $0x20] sm:$0xf]
        %v238 = vld [vmem:[#allocation2 + $0x24] sm:$0xf]
        %v239 = vld [vmem:[#allocation2 + $0x28] sm:$0xf]
        %v240 = vld [vmem:[#allocation2 + $0x2c] sm:$0xf]
        %v241 = vld [vmem:[#allocation2 + $0x30] sm:$0xf]
        %v242 = vld [vmem:[#allocation2 + $0x34] sm:$0xf]
        %v243 = vld [vmem:[#allocation2 + $0x38] sm:$0xf]
        %v244 = vld [vmem:[#allocation2 + $0x3c] sm:$0xf]
        %v247 = vunpack.c.l.b16 %v227
        %v248 = vunpack.c.l.b16 %v228
        %v249 = vpack.c.b16 %v248, %v247
        %v267 = vunpack.c.l.b16 %v229
        %v268 = vunpack.c.l.b16 %v230
        %v269 = vunpack.c.l.b16 %v231
        %v270 = vunpack.c.l.b16 %v232
        %v271 = vunpack.c.l.b16 %v233
        %v272 = vunpack.c.l.b16 %v234
        %v273 = vunpack.c.l.b16 %v235
        %v274 = vunpack.c.l.b16 %v236
        %v275 = vunpack.c.l.b16 %v237
        %v276 = vunpack.c.l.b16 %v238
        %v277 = vunpack.c.l.b16 %v239
        %v278 = vunpack.c.l.b16 %v240
        %v279 = vunpack.c.l.b16 %v241
        %v280 = vunpack.c.l.b16 %v242
        %v281 = vunpack.c.l.b16 %v243
        %v282 = vunpack.c.l.b16 %v244
        %v283 = vpack.c.b16 %v268, %v267
        %v284 = vpack.c.b16 %v270, %v269
        %v285 = vpack.c.b16 %v272, %v271
        %v286 = vpack.c.b16 %v274, %v273
        %v287 = vpack.c.b16 %v276, %v275
        %v288 = vpack.c.b16 %v278, %v277
        %v289 = vpack.c.b16 %v280, %v279
        %v290 = vpack.c.b16 %v282, %v281
        %299 = vmatprep.subr.bf16.mxu0 0
        %300 = vmatpush1.bf16.msra.mxu0 %v283
        %301 = vmatprep.subr.bf16.mxu0 0
        %302 = vmatpush1.bf16.msra.mxu0 %v284
        %303 = vmatprep.subr.bf16.mxu0 0
        %304 = vmatpush1.bf16.msra.mxu0 %v285
        %305 = vmatprep.subr.bf16.mxu0 0
        %306 = vmatpush1.bf16.msra.mxu0 %v286
        %307 = vmatprep.subr.bf16.mxu0 0
        %308 = vmatpush1.bf16.msra.mxu0 %v287
        %309 = vmatprep.subr.bf16.mxu0 0
        %310 = vmatpush1.bf16.msra.mxu0 %v288
        %311 = vmatprep.subr.bf16.mxu0 0
        %312 = vmatpush1.bf16.msra.mxu0 %v289
        %313 = vmatprep.subr.bf16.mxu0 0
        %314 = vmatpush1.bf16.msra.mxu0 %v290
        %315 = vmatprep.subr.bf16.mxu0 0
        %316 = vmatpush1.bf16.msra.mxu0 0
        %317 = vmatprep.subr.bf16.mxu0 0
        %318 = vmatpush1.bf16.msra.mxu0 0
        %319 = vmatprep.subr.bf16.mxu0 0
        %320 = vmatpush1.bf16.msra.mxu0 0
        %321 = vmatprep.subr.bf16.mxu0 0
        %322 = vmatpush1.bf16.msra.mxu0 0
        %323 = vmatprep.subr.bf16.mxu0 0
        %324 = vmatpush1.bf16.msra.mxu0 0
        %325 = vmatprep.subr.bf16.mxu0 0
        %326 = vmatpush1.bf16.msra.mxu0 0
        %327 = vmatprep.subr.bf16.mxu0 0
        %328 = vmatpush1.bf16.msra.mxu0 0
        %329 = vmatprep.subr.bf16.mxu0 0
        %330 = vmatpush1.bf16.msra.mxu0 0
        %331 = vmatprep.mubr.bf16.mxu0 0
        %332 = vmatmul.mubr.bf16.gmra.mrb[0].mxu0 %v249
        %v333 = vpop.f32.mrb[0].mxu0
        %v334 = vadd.f32 0.0, %v333
        %v335 = vpop.f32.mrb[0].mxu0
        %v336 = vpop.f32.mrb[0].mxu0
        %v337 = vadd.f32 0.0, %v336
        %v338 = vpop.f32.mrb[0].mxu0
        %339 = vdwg.mxu0
        %v340 = vadd.f32 %v225, %v334
        %v341 = vadd.f32 %v225, %v337
        %v342 = vld [vmem:[%s215] sm:$0xf]
        %v343 = vld [vmem:[%s215 + $0x4] sm:$0xf]
        %v344 = vld [vmem:[%s215 + $0x8] sm:$0x1]
        %s345 = scalar_lea.vmem [#allocation2], 64
        %v346 = vld [vmem:[%s345] sm:$0xf]
        %v347 = vld [vmem:[%s345 + $0x4] sm:$0xf]
        %v348 = vld [vmem:[%s345 + $0x8] sm:$0xf]
        %v349 = vld [vmem:[%s345 + $0xc] sm:$0xf]
        %v350 = vld [vmem:[%s345 + $0x10] sm:$0xf]
        %v351 = vld [vmem:[%s345 + $0x14] sm:$0xf]
        %v352 = vld [vmem:[%s345 + $0x18] sm:$0xf]
        %v353 = vld [vmem:[%s345 + $0x1c] sm:$0xf]
        %v354 = vld [vmem:[%s345 + $0x20] sm:$0xf]
        %v355 = vld [vmem:[%s345 + $0x24] sm:$0xf]
        %v356 = vld [vmem:[%s345 + $0x28] sm:$0xf]
        %v357 = vld [vmem:[%s345 + $0x2c] sm:$0xf]
        %v358 = vld [vmem:[%s345 + $0x30] sm:$0xf]
        %v359 = vld [vmem:[%s345 + $0x34] sm:$0xf]
        %v360 = vld [vmem:[%s345 + $0x38] sm:$0xf]
        %v361 = vld [vmem:[%s345 + $0x3c] sm:$0xf]
        %v365 = vunpack.c.l.b16 %v342
        %v366 = vunpack.c.l.b16 %v343
        %v367 = vunpack.c.l.b16 %v344
        %v368 = vpack.c.b16 %v366, %v365
        %v369 = vpack.c.b16 %v367, %v367
        %vm370 = vsmask.f32 7424
        %v372 = vshrl.u32 %v368, 16
        %v374 = vshll.u32 %v368, 16
        %v376 = vrot.slane %v374, 1
        %v377 = vor.u32 %v372, %v376
        %v379 = vshll.u32 %v369, 16
        %v381 = vrot.slane %v379, 1
        %v382 = vsel %vm370, %v377, %v381
        %v400 = vunpack.c.l.b16 %v346
        %v401 = vunpack.c.l.b16 %v347
        %v402 = vunpack.c.l.b16 %v348
        %v403 = vunpack.c.l.b16 %v349
        %v404 = vunpack.c.l.b16 %v350
        %v405 = vunpack.c.l.b16 %v351
        %v406 = vunpack.c.l.b16 %v352
        %v407 = vunpack.c.l.b16 %v353
        %v408 = vunpack.c.l.b16 %v354
        %v409 = vunpack.c.l.b16 %v355
        %v410 = vunpack.c.l.b16 %v356
        %v411 = vunpack.c.l.b16 %v357
        %v412 = vunpack.c.l.b16 %v358
        %v413 = vunpack.c.l.b16 %v359
        %v414 = vunpack.c.l.b16 %v360
        %v415 = vunpack.c.l.b16 %v361
        %v416 = vpack.c.b16 %v401, %v400
        %v417 = vpack.c.b16 %v403, %v402
        %v418 = vpack.c.b16 %v405, %v404
        %v419 = vpack.c.b16 %v407, %v406
        %v420 = vpack.c.b16 %v409, %v408
        %v421 = vpack.c.b16 %v411, %v410
        %v422 = vpack.c.b16 %v413, %v412
        %v423 = vpack.c.b16 %v415, %v414
        %432 = vmatprep.subr.bf16.mxu0 0
        %433 = vmatpush1.bf16.msra.mxu0 %v416
        %434 = vmatprep.subr.bf16.mxu0 0
        %435 = vmatpush1.bf16.msra.mxu0 %v417
        %436 = vmatprep.subr.bf16.mxu0 0
        %437 = vmatpush1.bf16.msra.mxu0 %v418
        %438 = vmatprep.subr.bf16.mxu0 0
        %439 = vmatpush1.bf16.msra.mxu0 %v419
        %440 = vmatprep.subr.bf16.mxu0 0
        %441 = vmatpush1.bf16.msra.mxu0 %v420
        %442 = vmatprep.subr.bf16.mxu0 0
        %443 = vmatpush1.bf16.msra.mxu0 %v421
        %444 = vmatprep.subr.bf16.mxu0 0
        %445 = vmatpush1.bf16.msra.mxu0 %v422
        %446 = vmatprep.subr.bf16.mxu0 0
        %447 = vmatpush1.bf16.msra.mxu0 %v423
        %448 = vmatprep.subr.bf16.mxu0 0
        %449 = vmatpush1.bf16.msra.mxu0 0
        %450 = vmatprep.subr.bf16.mxu0 0
        %451 = vmatpush1.bf16.msra.mxu0 0
        %452 = vmatprep.subr.bf16.mxu0 0
        %453 = vmatpush1.bf16.msra.mxu0 0
        %454 = vmatprep.subr.bf16.mxu0 0
        %455 = vmatpush1.bf16.msra.mxu0 0
        %456 = vmatprep.subr.bf16.mxu0 0
        %457 = vmatpush1.bf16.msra.mxu0 0
        %458 = vmatprep.subr.bf16.mxu0 0
        %459 = vmatpush1.bf16.msra.mxu0 0
        %460 = vmatprep.subr.bf16.mxu0 0
        %461 = vmatpush1.bf16.msra.mxu0 0
        %462 = vmatprep.subr.bf16.mxu0 0
        %463 = vmatpush1.bf16.msra.mxu0 0
        %464 = vmatprep.mubr.bf16.mxu0 0
        %465 = vmatmul.mubr.bf16.gmra.mrb[0].mxu0 %v382
        %v466 = vpop.f32.mrb[0].mxu0
        %v467 = vadd.f32 0.0, %v466
        %v468 = vpop.f32.mrb[0].mxu0
        %v469 = vpop.f32.mrb[0].mxu0
        %v470 = vadd.f32 0.0, %v469
        %v471 = vpop.f32.mrb[0].mxu0
        %472 = vdwg.mxu0
        %v473 = vadd.f32 %v340, %v467
        %v474 = vadd.f32 %v341, %v470
        %v475 = vld [vmem:[%s215] sm:$0xe]
        %s476 = scalar_lea.vmem [#allocation2], 128
        %v477 = vld [vmem:[%s476] sm:$0xf]
        %v478 = vld [vmem:[%s476 + $0x4] sm:$0xf]
        %v479 = vld [vmem:[%s476 + $0x8] sm:$0xf]
        %v480 = vld [vmem:[%s476 + $0xc] sm:$0xf]
        %v481 = vld [vmem:[%s476 + $0x10] sm:$0xf]
        %v482 = vld [vmem:[%s476 + $0x14] sm:$0xf]
        %v483 = vld [vmem:[%s476 + $0x18] sm:$0xf]
        %v484 = vld [vmem:[%s476 + $0x1c] sm:$0xf]
        %v485 = vld [vmem:[%s476 + $0x20] sm:$0xf]
        %v486 = vld [vmem:[%s476 + $0x24] sm:$0xf]
        %v487 = vld [vmem:[%s476 + $0x28] sm:$0xf]
        %v488 = vld [vmem:[%s476 + $0x2c] sm:$0xf]
        %v489 = vld [vmem:[%s476 + $0x30] sm:$0xf]
        %v490 = vld [vmem:[%s476 + $0x34] sm:$0xf]
        %v491 = vld [vmem:[%s476 + $0x38] sm:$0xf]
        %v492 = vld [vmem:[%s476 + $0x3c] sm:$0xf]
        %v494 = vunpack.c.l.b16 %v475
        %v495 = vpack.c.b16 %v366, %v494
        %vm496 = vcmask 1046528
        %v497 = vrot.slane %v495, 1
        %v498 = vrot.slane %v369, 1
        %v499 = vsel %vm496, %v497, %v498
        %v517 = vunpack.c.l.b16 %v477
        %v518 = vunpack.c.l.b16 %v478
        %v519 = vunpack.c.l.b16 %v479
        %v520 = vunpack.c.l.b16 %v480
        %v521 = vunpack.c.l.b16 %v481
        %v522 = vunpack.c.l.b16 %v482
        %v523 = vunpack.c.l.b16 %v483
        %v524 = vunpack.c.l.b16 %v484
        %v525 = vunpack.c.l.b16 %v485
        %v526 = vunpack.c.l.b16 %v486
        %v527 = vunpack.c.l.b16 %v487
        %v528 = vunpack.c.l.b16 %v488
        %v529 = vunpack.c.l.b16 %v489
        %v530 = vunpack.c.l.b16 %v490
        %v531 = vunpack.c.l.b16 %v491
        %v532 = vunpack.c.l.b16 %v492
        %v533 = vpack.c.b16 %v518, %v517
        %v534 = vpack.c.b16 %v520, %v519
        %v535 = vpack.c.b16 %v522, %v521
        %v536 = vpack.c.b16 %v524, %v523
        %v537 = vpack.c.b16 %v526, %v525
        %v538 = vpack.c.b16 %v528, %v527
        %v539 = vpack.c.b16 %v530, %v529
        %v540 = vpack.c.b16 %v532, %v531
        %549 = vmatprep.subr.bf16.mxu0 0
        %550 = vmatpush1.bf16.msra.mxu0 %v533
        %551 = vmatprep.subr.bf16.mxu0 0
        %552 = vmatpush1.bf16.msra.mxu0 %v534
        %553 = vmatprep.subr.bf16.mxu0 0
        %554 = vmatpush1.bf16.msra.mxu0 %v535
        %555 = vmatprep.subr.bf16.mxu0 0
        %556 = vmatpush1.bf16.msra.mxu0 %v536
        %557 = vmatprep.subr.bf16.mxu0 0
        %558 = vmatpush1.bf16.msra.mxu0 %v537
        %559 = vmatprep.subr.bf16.mxu0 0
        %560 = vmatpush1.bf16.msra.mxu0 %v538
        %561 = vmatprep.subr.bf16.mxu0 0
        %562 = vmatpush1.bf16.msra.mxu0 %v539
        %563 = vmatprep.subr.bf16.mxu0 0
        %564 = vmatpush1.bf16.msra.mxu0 %v540
        %565 = vmatprep.subr.bf16.mxu0 0
        %566 = vmatpush1.bf16.msra.mxu0 0
        %567 = vmatprep.subr.bf16.mxu0 0
        %568 = vmatpush1.bf16.msra.mxu0 0
        %569 = vmatprep.subr.bf16.mxu0 0
        %570 = vmatpush1.bf16.msra.mxu0 0
        %571 = vmatprep.subr.bf16.mxu0 0
        %572 = vmatpush1.bf16.msra.mxu0 0
        %573 = vmatprep.subr.bf16.mxu0 0
        %574 = vmatpush1.bf16.msra.mxu0 0
        %575 = vmatprep.subr.bf16.mxu0 0
        %576 = vmatpush1.bf16.msra.mxu0 0
        %577 = vmatprep.subr.bf16.mxu0 0
        %578 = vmatpush1.bf16.msra.mxu0 0
        %579 = vmatprep.subr.bf16.mxu0 0
        %580 = vmatpush1.bf16.msra.mxu0 0
        %581 = vmatprep.mubr.bf16.mxu0 0
        %582 = vmatmul.mubr.bf16.gmra.mrb[0].mxu0 %v499
        %v583 = vpop.f32.mrb[0].mxu0
        %v584 = vadd.f32 0.0, %v583
        %v585 = vpop.f32.mrb[0].mxu0
        %v586 = vpop.f32.mrb[0].mxu0
        %v587 = vadd.f32 0.0, %v586
        %v588 = vpop.f32.mrb[0].mxu0
        %589 = vdwg.mxu0
        %v590 = vadd.f32 %v473, %v584
        %v591 = vadd.f32 %v474, %v587
        %v592 = vmax.f32 %v590, 0.0
        %v593 = vmax.f32 %v591, 0.0
        %594 = vst [vmem:[%s210] sm:$0xff] %v592
        %595 = vst [vmem:[%s210 + $0x8] sm:$0xff] %v593
        %s596 = sand.u32 %s118, 1
        %s597 = scalar_lea.sflag [#allocation4], %s596
        %s598 = sand.u32 %s118, 1
        %s599 = smul.addr %s598, 16
        %s600 = scalar_lea.vmem [#allocation5], %s599
        // Predicated region
        $region37: #{tpu_custom_call.1} parent=31 // pred_check
          %p601 = pneg %p128
        $region38: #{tpu_custom_call.1} parent=31 // pred_check_branch
          %603 = sbr.rel (%p601) target = $region40
        $region39: #{tpu_custom_call.1} parent=31 // pred_region
          %s605 = ssub.s32 256, 256
          %606 = vsyncadd %s597, %s605
          %s607 = smul.addr %s23, 2
          %s608 = sadd.s32 %s22, %s607
          %s609 = smul.addr %s608, 128
          %s610 = scalar_lea.hbm %s3, %s609
          %s611 = sshll.u32 %s600, 4
          %s612 = int_to_ptr.vmem [resolvable:$true] %s611
          %617 = dma.vmem_to_hbm [thread:$0]  %s612, 256, %s610, %s597, 128, 128, 8
        $region40: #{tpu_custom_call.1} parent=31 // pred_fallthru
          _
      $region32: #{tpu_custom_call.1} parent=5 // pred_fallthru
        _
      %p618 = scmp.le.s32.totalorder 2, %s13
      // Predicated region
      $region41: #{tpu_custom_call.1} parent=5 // pred_check
        %p619 = pneg %p618
      $region42: #{tpu_custom_call.1} parent=5 // pred_check_branch
        %621 = sbr.rel (%p619) target = $region44
      $region43: #{tpu_custom_call.1} parent=5 // pred_region
        %s622 = ssub.s32 %s13, 2
        // Predicated region
        $region45: #{tpu_custom_call.1} parent=43 // pred_check
          %p623 = pneg %p134
        $region46: #{tpu_custom_call.1} parent=43 // pred_check_branch
          %625 = sbr.rel (%p623) target = $region48
        $region47: #{tpu_custom_call.1} parent=43 // pred_region
          %s626 = sand.u32 %s119, 1
          %s627 = scalar_lea.sflag [#allocation4], %s626
          %s628 = sand.u32 %s119, 1
          %s629 = smul.addr %s628, 16
          %s630 = scalar_lea.vmem [#allocation5], %s629
          %631 = dma.done %s627, 256
        $region48: #{tpu_custom_call.1} parent=43 // pred_fallthru
          _
      $region44: #{tpu_custom_call.1} parent=5 // pred_fallthru
        _
    $region6: #{tpu_custom_call.1} parent=1 // loop_footer
      %s17 = sadd.s32 1, %s13
    $region7: #{tpu_custom_call.1} parent=1 // loop_footer_branch
      %12 = sbr.rel target = $region3
    $region8: #{tpu_custom_call.1} parent=1 // loop_exit
      _
    %632 = vsyncpa [#allocation3], 1
    %s633 = scalar_lea.sflag [#allocation3], 1
    %634 = vsyncpa %s633, 1
    %635 = vsyncpa [#allocation4], 1
    %s636 = scalar_lea.sflag [#allocation4], 1
    %637 = vsyncpa %s636, 1

// kernel: tpu_custom_call.1
$region0: #{tpu_custom_call.1}
  #allocation0 [shape = 'u32[]', space=smem, size = 0x4, offset = 0x4, fixed_abs, tag = 'smem constant byte address 0x4 - core index']
  #allocation1 [shape = 'u32[144,128]{1,0:T(1,128)}', space=vmem, size = 0x12000, scoped, tag = 'internal scratch']
  %s0 = inlined_call_operand.vmem [shape: bf16[2,18,128], index: 0, kind: input, shape index: {}]
  %s1 = inlined_call_operand.hbm [shape: bf16[3,128,128], index: 1, kind: input, shape index: {}]
  %s2 = inlined_call_operand.vmem [shape: f32[1,128], index: 2, kind: input, shape index: {}]
  %s3 = inlined_call_operand.hbm [shape: f32[2,16,128], index: 3, kind: output, shape index: {}]
  %s4 = sld [smem:[#allocation0]]
  $region49: #{tpu_custom_call.1} parent=0
    _
  %s6 = ssub.s32 1, %s4
  %s7 = scalar_select 0, %s6, %s4
  $region1: #{tpu_custom_call.1} parent=0
    #allocation2 [shape = 'u8[98304]{0}', space=vmem, size = 0x18000, scoped, tag = 'input window, operand 1, single buffered']
    #allocation3 [shape = 's32[2]{0}', space=sflag, size = 0x8, scoped, tag = 'scoped memory for tpu_custom_call.1']
    #allocation4 [shape = 's32[2]{0}', space=sflag, size = 0x8, scoped, tag = 'scoped memory for tpu_custom_call.1']
    #allocation5 [shape = 'u8[16384]{0}', space=vmem, size = 0x4000, scoped, tag = 'output window, operand 0']
    %8 = vsyncpa [#allocation3], 0
    %9 = vsyncpa [#allocation4], 0
    %s10 = scalar_lea.sflag [#allocation4], 1
    %11 = vsyncpa %s10, 0
    loop: start=0, step=1, limit=4
    $region2: #{tpu_custom_call.1} parent=1 // loop_pre_header
      _
    $region3: #{tpu_custom_call.1} parent=1 // loop_header
      %s13 = sphi 0, %s17
      %p14 = scmp.ge.s32.totalorder %s13, 4
      %s20 = sphi 0, %s32
      %s21 = sphi 0, %s28
      %s22 = sphi 0, %s20
      %s23 = sphi 0, %s21
      %s24 = sphi 0, %s22
      %s25 = sphi 0, %s23
      %s35 = sphi 0, %s37
      %s38 = sphi 0, %s35
      %s39 = sphi 0, %s38
      %s55 = sphi 0, %s39
      %s61 = sphi 0, %s63
      %s64 = sphi 0, %s61
      %s65 = sphi 0, %s64
      %s81 = sphi 0, %s65
      %s87 = sphi 0, %s89
      %s90 = sphi 0, %s87
      %s91 = sphi 0, %s90
      %s107 = sphi 0, %s91
      %s115 = sphi 0, %s117
      %s118 = sphi 0, %s115
      %s119 = sphi 0, %s118
      %s135 = sphi 0, %s119
    $region4: #{tpu_custom_call.1} parent=1 // loop_header_branch
      %16 = sbr.rel (%p14) target = $region8
    $region5: #{tpu_custom_call.1} parent=1 // loop_body
      %s18 = ssub.s32 %s13, 1
      %s19 = ssub.s32 %s13, 2
      %s26 = sadd.s32 1, %s21
      %p27 = scmp.ge.s32.totalorder %s26, 2
      %s28 = scalar_select %p27, 0, %s26
      %s29 = sadd.s32 1, %s20
      %s30 = scalar_select %p27, %s29, %s20
      %p31 = scmp.ge.s32.totalorder %s30, 1
      %s32 = scalar_select %p31, 0, %s30
      %s33 = ssub.s32 %s21, %s28
      %p34 = scmp.eq.s32.totalorder %s33, 0
      %s36 = sadd.s32 %s35, 1
      %s37 = scalar_select %p34, %s35, %s36
      %p40 = pneg %p34
      %p41 = scmp.eq.s32.totalorder %s13, 1
      %p42 = por %p40, %p41
      %p43 = scmp.ne.s32.totalorder %s35, %s38
      %p44 = scmp.eq.s32.totalorder %s13, 0
      %p45 = por %p43, %p44
      %p46 = scmp.ne.s32.totalorder %s35, %s38
      %p47 = scmp.eq.s32.totalorder %s18, 1
      %p48 = por %p46, %p47
      %p49 = scmp.ne.s32.totalorder %s38, %s39
      %p50 = scmp.eq.s32.totalorder %s18, 0
      %p51 = por %p49, %p50
      %p52 = scmp.ne.s32.totalorder %s38, %s39
      %p53 = scmp.eq.s32.totalorder %s19, 1
      %p54 = por %p52, %p53
      %p56 = scmp.ne.s32.totalorder %s39, %s55
      %p57 = scmp.eq.s32.totalorder %s19, 0
      %p58 = por %p56, %p57
      %s59 = ssub.s32 %s20, %s32
      %p60 = scmp.eq.s32.totalorder %s59, 0
      %s62 = sadd.s32 %s61, 1
      %s63 = scalar_select %p60, %s61, %s62
      %p66 = pneg %p60
      %p67 = scmp.eq.s32.totalorder %s13, 1
      %p68 = por %p66, %p67
      %p69 = scmp.ne.s32.totalorder %s61, %s64
      %p70 = scmp.eq.s32.totalorder %s13, 0
      %p71 = por %p69, %p70
      %p72 = scmp.ne.s32.totalorder %s61, %s64
      %p73 = scmp.eq.s32.totalorder %s18, 1
      %p74 = por %p72, %p73
      %p75 = scmp.ne.s32.totalorder %s64, %s65
      %p76 = scmp.eq.s32.totalorder %s18, 0
      %p77 = por %p75, %p76
      %p78 = scmp.ne.s32.totalorder %s64, %s65
      %p79 = scmp.eq.s32.totalorder %s19, 1
      %p80 = por %p78, %p79
      %p82 = scmp.ne.s32.totalorder %s65, %s81
      %p83 = scmp.eq.s32.totalorder %s19, 0
      %p84 = por %p82, %p83
      %s85 = ssub.s32 %s20, %s32
      %p86 = scmp.eq.s32.totalorder %s85, 0
      %s88 = sadd.s32 %s87, 1
      %s89 = scalar_select %p86, %s87, %s88
      %p92 = pneg %p86
      %p93 = scmp.eq.s32.totalorder %s13, 1
      %p94 = por %p92, %p93
      %p95 = scmp.ne.s32.totalorder %s87, %s90
      %p96 = scmp.eq.s32.totalorder %s13, 0
      %p97 = por %p95, %p96
      %p98 = scmp.ne.s32.totalorder %s87, %s90
      %p99 = scmp.eq.s32.totalorder %s18, 1
      %p100 = por %p98, %p99
      %p101 = scmp.ne.s32.totalorder %s90, %s91
      %p102 = scmp.eq.s32.totalorder %s18, 0
      %p103 = por %p101, %p102
      %p104 = scmp.ne.s32.totalorder %s90, %s91
      %p105 = scmp.eq.s32.totalorder %s19, 1
      %p106 = por %p104, %p105
      %p108 = scmp.ne.s32.totalorder %s91, %s107
      %p109 = scmp.eq.s32.totalorder %s19, 0
      %p110 = por %p108, %p109
      %s111 = ssub.s32 %s21, %s28
      %s112 = ssub.s32 %s20, %s32
      %s113 = sor.u32 %s111, %s112
      %p114 = scmp.eq.s32.totalorder %s113, 0
      %s116 = sadd.s32 %s115, 1
      %s117 = scalar_select %p114, %s115, %s116
      %p120 = pneg %p114
      %p121 = scmp.eq.s32.totalorder %s13, 1
      %p122 = por %p120, %p121
      %p123 = scmp.ne.s32.totalorder %s115, %s118
      %p124 = scmp.eq.s32.totalorder %s13, 0
      %p125 = por %p123, %p124
      %p126 = scmp.ne.s32.totalorder %s115, %s118
      %p127 = scmp.eq.s32.totalorder %s18, 1
      %p128 = por %p126, %p127
      %p129 = scmp.ne.s32.totalorder %s118, %s119
      %p130 = scmp.eq.s32.totalorder %s18, 0
      %p131 = por %p129, %p130
      %p132 = scmp.ne.s32.totalorder %s118, %s119
      %p133 = scmp.eq.s32.totalorder %s19, 1
      %p134 = por %p132, %p133
      %p136 = scmp.ne.s32.totalorder %s119, %s135
      %p137 = scmp.eq.s32.totalorder %s19, 0
      %p138 = por %p136, %p137
      %p139 = scmp.le.s32.totalorder 1, %s13
      %p140 = scmp.lt.s32.totalorder %s13, 3
      %p141 = pnand %p139, %p140
      %p142 = pneg %p141
      // Predicated region
      $region9: #{tpu_custom_call.1} parent=5 // pred_check
        _
      $region10: #{tpu_custom_call.1} parent=5 // pred_check_branch
        %144 = sbr.rel (%p141) target = $region12
      $region11: #{tpu_custom_call.1} parent=5 // pred_region
        %s145 = ssub.s32 %s13, 1
        // Predicated region
        $region13: #{tpu_custom_call.1} parent=11 // pred_check
          %p146 = pneg %p77
        $region14: #{tpu_custom_call.1} parent=11 // pred_check_branch
          %148 = sbr.rel (%p146) target = $region16
        $region15: #{tpu_custom_call.1} parent=11 // pred_region
          %s150 = ssub.s32 3072, 3072
          %151 = vsyncadd [#allocation3], %s150
          %s152 = smul.addr %s22, 64
          %s153 = scalar_lea.hbm %s1, %s152
          %s154 = sshll.u32 [#allocation2], 4
          %s155 = int_to_ptr.vmem [resolvable:$true] %s154
          %160 = dma.hbm_to_vmem [thread:$0]  %s153, 3072, %s155, [#allocation3], 64, 64, 4
        $region16: #{tpu_custom_call.1} parent=11 // pred_fallthru
          _
        // Predicated region
        $region17: #{tpu_custom_call.1} parent=11 // pred_check
          %p161 = pneg %p103
        $region18: #{tpu_custom_call.1} parent=11 // pred_check_branch
          %163 = sbr.rel (%p161) target = $region20
        $region19: #{tpu_custom_call.1} parent=11 // pred_region
          %p164 = scmp.lt.s32.totalorder %s22, 0
          %s165 = scalar_select %p164, %s22, 0
          %s166 = scalar_lea.vmem %s2, %s165
        $region20: #{tpu_custom_call.1} parent=11 // pred_fallthru
          _
      $region12: #{tpu_custom_call.1} parent=5 // pred_fallthru
        _
      %p167 = scmp.lt.s32.totalorder %s13, 2
      // Predicated region
      $region21: #{tpu_custom_call.1} parent=5 // pred_check
        %p168 = pneg %p167
      $region22: #{tpu_custom_call.1} parent=5 // pred_check_branch
        %170 = sbr.rel (%p168) target = $region24
      $region23: #{tpu_custom_call.1} parent=5 // pred_region
        // Predicated region
        $region25: #{tpu_custom_call.1} parent=23 // pred_check
          %p171 = pneg %p45
        $region26: #{tpu_custom_call.1} parent=23 // pred_check_branch
          %173 = sbr.rel (%p171) target = $region28
        $region27: #{tpu_custom_call.1} parent=23 // pred_region
          %p174 = scmp.lt.s32.totalorder %s21, 1
          %s175 = scalar_select %p174, %s21, 1
          %s176 = smul.addr %s175, 3
          %s177 = smul.addr %s176, 4
          %s178 = scalar_lea.vmem %s0, %s177
        $region28: #{tpu_custom_call.1} parent=23 // pred_fallthru
          _
      $region24: #{tpu_custom_call.1} parent=5 // pred_fallthru
        _
      %p179 = scmp.le.s32.totalorder 1, %s13
      %p180 = scmp.lt.s32.totalorder %s13, 3
      %p181 = pnand %p179, %p180
      %p182 = pneg %p181
      // Predicated region
      $region29: #{tpu_custom_call.1} parent=5 // pred_check
        _
      $region30: #{tpu_custom_call.1} parent=5 // pred_check_branch
        %184 = sbr.rel (%p181) target = $region32
      $region31: #{tpu_custom_call.1} parent=5 // pred_region
        %s185 = ssub.s32 %s13, 1
        // Predicated region
        $region33: #{tpu_custom_call.1} parent=31 // pred_check
          %p186 = pneg %p77
        $region34: #{tpu_custom_call.1} parent=31 // pred_check_branch
          %188 = sbr.rel (%p186) target = $region36
        $region35: #{tpu_custom_call.1} parent=31 // pred_region
          %189 = dma.done [#allocation3], 3072
        $region36: #{tpu_custom_call.1} parent=31 // pred_fallthru
          _
        %p190 = scmp.lt.s32.totalorder %s23, 1
        %s191 = scalar_select %p190, %s23, 1
        %s192 = smul.addr %s191, 3
        %s193 = smul.addr %s192, 4
        %s194 = scalar_lea.vmem %s0, %s193
        %p195 = pneg %p51
        %p196 = pneg %p48
        %p197 = pneg %p77
        %p198 = pneg %p74
        %p199 = scmp.lt.s32.totalorder %s22, 0
        %s200 = scalar_select %p199, %s22, 0
        %s201 = scalar_lea.vmem %s2, %s200
        %p202 = pneg %p103
        %p203 = pneg %p100
        %p204 = pneg %p131
        %p205 = pneg %p128
        %s206 = sand.u32 %s118, 1
        %s207 = scalar_lea.sflag [#allocation4], %s206
        %s208 = sand.u32 %s118, 1
        %s209 = smul.addr %s208, 16
        %s210 = scalar_lea.vmem [#allocation5], %s209
        %p211 = scmp.lt.s32.totalorder %s23, 1
        %s212 = scalar_select %p211, %s23, 1
        %s213 = smul.addr %s212, 3
        %s214 = smul.addr %s213, 4
        %s215 = scalar_lea.vmem %s0, %s214
        %p216 = scmp.lt.s32.totalorder %s22, 0
        %s217 = scalar_select %p216, %s22, 0
        %s218 = scalar_lea.vmem %s2, %s217
        %v220 = vld [vmem:[%s218] sm:$0x1]
        %v222 = vlaneseq
        %v223 = vshrl.u32 %v222, 7
        %v224 = vsub.s32 0, %v223
        %v225 = vrot.slane %v220, %v224
        %v227 = vld [vmem:[%s215] sm:$0xf]
        %v228 = vld [vmem:[%s215 + $0x4] sm:$0xf]
        %v229 = vld [vmem:[#allocation2] sm:$0xf]
        %v230 = vld [vmem:[#allocation2 + $0x4] sm:$0xf]
        %v231 = vld [vmem:[#allocation2 + $0x8] sm:$0xf]
        %v232 = vld [vmem:[#allocation2 + $0xc] sm:$0xf]
        %v233 = vld [vmem:[#allocation2 + $0x10] sm:$0xf]
        %v234 = vld [vmem:[#allocation2 + $0x14] sm:$0xf]
        %v235 = vld [vmem:[#allocation2 + $0x18] sm:$0xf]
        %v236 = vld [vmem:[#allocation2 + $0x1c] sm:$0xf]
        %v237 = vld [vmem:[#allocation2 + $0x20] sm:$0xf]
        %v238 = vld [vmem:[#allocation2 + $0x24] sm:$0xf]
        %v239 = vld [vmem:[#allocation2 + $0x28] sm:$0xf]
        %v240 = vld [vmem:[#allocation2 + $0x2c] sm:$0xf]
        %v241 = vld [vmem:[#allocation2 + $0x30] sm:$0xf]
        %v242 = vld [vmem:[#allocation2 + $0x34] sm:$0xf]
        %v243 = vld [vmem:[#allocation2 + $0x38] sm:$0xf]
        %v244 = vld [vmem:[#allocation2 + $0x3c] sm:$0xf]
        %v247 = vunpack.c.l.b16 %v227
        %v248 = vunpack.c.l.b16 %v228
        %v249 = vpack.c.b16 %v248, %v247
        %v267 = vunpack.c.l.b16 %v229
        %v268 = vunpack.c.l.b16 %v230
        %v269 = vunpack.c.l.b16 %v231
        %v270 = vunpack.c.l.b16 %v232
        %v271 = vunpack.c.l.b16 %v233
        %v272 = vunpack.c.l.b16 %v234
        %v273 = vunpack.c.l.b16 %v235
        %v274 = vunpack.c.l.b16 %v236
        %v275 = vunpack.c.l.b16 %v237
        %v276 = vunpack.c.l.b16 %v238
        %v277 = vunpack.c.l.b16 %v239
        %v278 = vunpack.c.l.b16 %v240
        %v279 = vunpack.c.l.b16 %v241
        %v280 = vunpack.c.l.b16 %v242
        %v281 = vunpack.c.l.b16 %v243
        %v282 = vunpack.c.l.b16 %v244
        %v283 = vpack.c.b16 %v268, %v267
        %v284 = vpack.c.b16 %v270, %v269
        %v285 = vpack.c.b16 %v272, %v271
        %v286 = vpack.c.b16 %v274, %v273
        %v287 = vpack.c.b16 %v276, %v275
        %v288 = vpack.c.b16 %v278, %v277
        %v289 = vpack.c.b16 %v280, %v279
        %v290 = vpack.c.b16 %v282, %v281
        %299 = vmatprep.subr.bf16.mxu0 0
        %300 = vmatpush1.bf16.msra.mxu0 %v283
        %301 = vmatprep.subr.bf16.mxu0 0
        %302 = vmatpush1.bf16.msra.mxu0 %v284
        %303 = vmatprep.subr.bf16.mxu0 0
        %304 = vmatpush1.bf16.msra.mxu0 %v285
        %305 = vmatprep.subr.bf16.mxu0 0
        %306 = vmatpush1.bf16.msra.mxu0 %v286
        %307 = vmatprep.subr.bf16.mxu0 0
        %308 = vmatpush1.bf16.msra.mxu0 %v287
        %309 = vmatprep.subr.bf16.mxu0 0
        %310 = vmatpush1.bf16.msra.mxu0 %v288
        %311 = vmatprep.subr.bf16.mxu0 0
        %312 = vmatpush1.bf16.msra.mxu0 %v289
        %313 = vmatprep.subr.bf16.mxu0 0
        %314 = vmatpush1.bf16.msra.mxu0 %v290
        %315 = vmatprep.subr.bf16.mxu0 0
        %316 = vmatpush1.bf16.msra.mxu0 0
        %317 = vmatprep.subr.bf16.mxu0 0
        %318 = vmatpush1.bf16.msra.mxu0 0
        %319 = vmatprep.subr.bf16.mxu0 0
        %320 = vmatpush1.bf16.msra.mxu0 0
        %321 = vmatprep.subr.bf16.mxu0 0
        %322 = vmatpush1.bf16.msra.mxu0 0
        %323 = vmatprep.subr.bf16.mxu0 0
        %324 = vmatpush1.bf16.msra.mxu0 0
        %325 = vmatprep.subr.bf16.mxu0 0
        %326 = vmatpush1.bf16.msra.mxu0 0
        %327 = vmatprep.subr.bf16.mxu0 0
        %328 = vmatpush1.bf16.msra.mxu0 0
        %329 = vmatprep.subr.bf16.mxu0 0
        %330 = vmatpush1.bf16.msra.mxu0 0
        %331 = vmatprep.mubr.bf16.mxu0 0
        %332 = vmatmul.mubr.bf16.gmra.mrb[0].mxu0 %v249
        %v333 = vpop.f32.mrb[0].mxu0
        %v334 = vadd.f32 0.0, %v333
        %v335 = vpop.f32.mrb[0].mxu0
        %v336 = vpop.f32.mrb[0].mxu0
        %v337 = vadd.f32 0.0, %v336
        %v338 = vpop.f32.mrb[0].mxu0
        %339 = vdwg.mxu0
        %v340 = vadd.f32 %v225, %v334
        %v341 = vadd.f32 %v225, %v337
        %v342 = vld [vmem:[%s215] sm:$0xf]
        %v343 = vld [vmem:[%s215 + $0x4] sm:$0xf]
        %v344 = vld [vmem:[%s215 + $0x8] sm:$0x1]
        %s345 = scalar_lea.vmem [#allocation2], 64
        %v346 = vld [vmem:[%s345] sm:$0xf]
        %v347 = vld [vmem:[%s345 + $0x4] sm:$0xf]
        %v348 = vld [vmem:[%s345 + $0x8] sm:$0xf]
        %v349 = vld [vmem:[%s345 + $0xc] sm:$0xf]
        %v350 = vld [vmem:[%s345 + $0x10] sm:$0xf]
        %v351 = vld [vmem:[%s345 + $0x14] sm:$0xf]
        %v352 = vld [vmem:[%s345 + $0x18] sm:$0xf]
        %v353 = vld [vmem:[%s345 + $0x1c] sm:$0xf]
        %v354 = vld [vmem:[%s345 + $0x20] sm:$0xf]
        %v355 = vld [vmem:[%s345 + $0x24] sm:$0xf]
        %v356 = vld [vmem:[%s345 + $0x28] sm:$0xf]
        %v357 = vld [vmem:[%s345 + $0x2c] sm:$0xf]
        %v358 = vld [vmem:[%s345 + $0x30] sm:$0xf]
        %v359 = vld [vmem:[%s345 + $0x34] sm:$0xf]
        %v360 = vld [vmem:[%s345 + $0x38] sm:$0xf]
        %v361 = vld [vmem:[%s345 + $0x3c] sm:$0xf]
        %v365 = vunpack.c.l.b16 %v342
        %v366 = vunpack.c.l.b16 %v343
        %v367 = vunpack.c.l.b16 %v344
        %v368 = vpack.c.b16 %v366, %v365
        %v369 = vpack.c.b16 %v367, %v367
        %vm370 = vsmask.f32 7424
        %v372 = vshrl.u32 %v368, 16
        %v374 = vshll.u32 %v368, 16
        %v376 = vrot.slane %v374, 1
        %v377 = vor.u32 %v372, %v376
        %v379 = vshll.u32 %v369, 16
        %v381 = vrot.slane %v379, 1
        %v382 = vsel %vm370, %v377, %v381
        %v400 = vunpack.c.l.b16 %v346
        %v401 = vunpack.c.l.b16 %v347
        %v402 = vunpack.c.l.b16 %v348
        %v403 = vunpack.c.l.b16 %v349
        %v404 = vunpack.c.l.b16 %v350
        %v405 = vunpack.c.l.b16 %v351
        %v406 = vunpack.c.l.b16 %v352
        %v407 = vunpack.c.l.b16 %v353
        %v408 = vunpack.c.l.b16 %v354
        %v409 = vunpack.c.l.b16 %v355
        %v410 = vunpack.c.l.b16 %v356
        %v411 = vunpack.c.l.b16 %v357
        %v412 = vunpack.c.l.b16 %v358
        %v413 = vunpack.c.l.b16 %v359
        %v414 = vunpack.c.l.b16 %v360
        %v415 = vunpack.c.l.b16 %v361
        %v416 = vpack.c.b16 %v401, %v400
        %v417 = vpack.c.b16 %v403, %v402
        %v418 = vpack.c.b16 %v405, %v404
        %v419 = vpack.c.b16 %v407, %v406
        %v420 = vpack.c.b16 %v409, %v408
        %v421 = vpack.c.b16 %v411, %v410
        %v422 = vpack.c.b16 %v413, %v412
        %v423 = vpack.c.b16 %v415, %v414
        %432 = vmatprep.subr.bf16.mxu0 0
        %433 = vmatpush1.bf16.msra.mxu0 %v416
        %434 = vmatprep.subr.bf16.mxu0 0
        %435 = vmatpush1.bf16.msra.mxu0 %v417
        %436 = vmatprep.subr.bf16.mxu0 0
        %437 = vmatpush1.bf16.msra.mxu0 %v418
        %438 = vmatprep.subr.bf16.mxu0 0
        %439 = vmatpush1.bf16.msra.mxu0 %v419
        %440 = vmatprep.subr.bf16.mxu0 0
        %441 = vmatpush1.bf16.msra.mxu0 %v420
        %442 = vmatprep.subr.bf16.mxu0 0
        %443 = vmatpush1.bf16.msra.mxu0 %v421
        %444 = vmatprep.subr.bf16.mxu0 0
        %445 = vmatpush1.bf16.msra.mxu0 %v422
        %446 = vmatprep.subr.bf16.mxu0 0
        %447 = vmatpush1.bf16.msra.mxu0 %v423
        %448 = vmatprep.subr.bf16.mxu0 0
        %449 = vmatpush1.bf16.msra.mxu0 0
        %450 = vmatprep.subr.bf16.mxu0 0
        %451 = vmatpush1.bf16.msra.mxu0 0
        %452 = vmatprep.subr.bf16.mxu0 0
        %453 = vmatpush1.bf16.msra.mxu0 0
        %454 = vmatprep.subr.bf16.mxu0 0
        %455 = vmatpush1.bf16.msra.mxu0 0
        %456 = vmatprep.subr.bf16.mxu0 0
        %457 = vmatpush1.bf16.msra.mxu0 0
        %458 = vmatprep.subr.bf16.mxu0 0
        %459 = vmatpush1.bf16.msra.mxu0 0
        %460 = vmatprep.subr.bf16.mxu0 0
        %461 = vmatpush1.bf16.msra.mxu0 0
        %462 = vmatprep.subr.bf16.mxu0 0
        %463 = vmatpush1.bf16.msra.mxu0 0
        %464 = vmatprep.mubr.bf16.mxu0 0
        %465 = vmatmul.mubr.bf16.gmra.mrb[0].mxu0 %v382
        %v466 = vpop.f32.mrb[0].mxu0
        %v467 = vadd.f32 0.0, %v466
        %v468 = vpop.f32.mrb[0].mxu0
        %v469 = vpop.f32.mrb[0].mxu0
        %v470 = vadd.f32 0.0, %v469
        %v471 = vpop.f32.mrb[0].mxu0
        %472 = vdwg.mxu0
        %v473 = vadd.f32 %v340, %v467
        %v474 = vadd.f32 %v341, %v470
        %v475 = vld [vmem:[%s215] sm:$0xe]
        %s476 = scalar_lea.vmem [#allocation2], 128
        %v477 = vld [vmem:[%s476] sm:$0xf]
        %v478 = vld [vmem:[%s476 + $0x4] sm:$0xf]
        %v479 = vld [vmem:[%s476 + $0x8] sm:$0xf]
        %v480 = vld [vmem:[%s476 + $0xc] sm:$0xf]
        %v481 = vld [vmem:[%s476 + $0x10] sm:$0xf]
        %v482 = vld [vmem:[%s476 + $0x14] sm:$0xf]
        %v483 = vld [vmem:[%s476 + $0x18] sm:$0xf]
        %v484 = vld [vmem:[%s476 + $0x1c] sm:$0xf]
        %v485 = vld [vmem:[%s476 + $0x20] sm:$0xf]
        %v486 = vld [vmem:[%s476 + $0x24] sm:$0xf]
        %v487 = vld [vmem:[%s476 + $0x28] sm:$0xf]
        %v488 = vld [vmem:[%s476 + $0x2c] sm:$0xf]
        %v489 = vld [vmem:[%s476 + $0x30] sm:$0xf]
        %v490 = vld [vmem:[%s476 + $0x34] sm:$0xf]
        %v491 = vld [vmem:[%s476 + $0x38] sm:$0xf]
        %v492 = vld [vmem:[%s476 + $0x3c] sm:$0xf]
        %v494 = vunpack.c.l.b16 %v475
        %v495 = vpack.c.b16 %v366, %v494
        %vm496 = vcmask 1046528
        %v497 = vrot.slane %v495, 1
        %v498 = vrot.slane %v369, 1
        %v499 = vsel %vm496, %v497, %v498
        %v517 = vunpack.c.l.b16 %v477
        %v518 = vunpack.c.l.b16 %v478
        %v519 = vunpack.c.l.b16 %v479
        %v520 = vunpack.c.l.b16 %v480
        %v521 = vunpack.c.l.b16 %v481
        %v522 = vunpack.c.l.b16 %v482
        %v523 = vunpack.c.l.b16 %v483
        %v524 = vunpack.c.l.b16 %v484
        %v525 = vunpack.c.l.b16 %v485
        %v526 = vunpack.c.l.b16 %v486
        %v527 = vunpack.c.l.b16 %v487
        %v528 = vunpack.c.l.b16 %v488
        %v529 = vunpack.c.l.b16 %v489
        %v530 = vunpack.c.l.b16 %v490
        %v531 = vunpack.c.l.b16 %v491
        %v532 = vunpack.c.l.b16 %v492
        %v533 = vpack.c.b16 %v518, %v517
        %v534 = vpack.c.b16 %v520, %v519
        %v535 = vpack.c.b16 %v522, %v521
        %v536 = vpack.c.b16 %v524, %v523
        %v537 = vpack.c.b16 %v526, %v525
        %v538 = vpack.c.b16 %v528, %v527
        %v539 = vpack.c.b16 %v530, %v529
        %v540 = vpack.c.b16 %v532, %v531
        %549 = vmatprep.subr.bf16.mxu0 0
        %550 = vmatpush1.bf16.msra.mxu0 %v533
        %551 = vmatprep.subr.bf16.mxu0 0
        %552 = vmatpush1.bf16.msra.mxu0 %v534
        %553 = vmatprep.subr.bf16.mxu0 0
        %554 = vmatpush1.bf16.msra.mxu0 %v535
        %555 = vmatprep.subr.bf16.mxu0 0
        %556 = vmatpush1.bf16.msra.mxu0 %v536
        %557 = vmatprep.subr.bf16.mxu0 0
        %558 = vmatpush1.bf16.msra.mxu0 %v537
        %559 = vmatprep.subr.bf16.mxu0 0
        %560 = vmatpush1.bf16.msra.mxu0 %v538
        %561 = vmatprep.subr.bf16.mxu0 0
        %562 = vmatpush1.bf16.msra.mxu0 %v539
        %563 = vmatprep.subr.bf16.mxu0 0
        %564 = vmatpush1.bf16.msra.mxu0 %v540
        %565 = vmatprep.subr.bf16.mxu0 0
        %566 = vmatpush1.bf16.msra.mxu0 0
        %567 = vmatprep.subr.bf16.mxu0 0
        %568 = vmatpush1.bf16.msra.mxu0 0
        %569 = vmatprep.subr.bf16.mxu0 0
        %570 = vmatpush1.bf16.msra.mxu0 0
        %571 = vmatprep.subr.bf16.mxu0 0
        %572 = vmatpush1.bf16.msra.mxu0 0
        %573 = vmatprep.subr.bf16.mxu0 0
        %574 = vmatpush1.bf16.msra.mxu0 0
        %575 = vmatprep.subr.bf16.mxu0 0
        %576 = vmatpush1.bf16.msra.mxu0 0
        %577 = vmatprep.subr.bf16.mxu0 0
        %578 = vmatpush1.bf16.msra.mxu0 0
        %579 = vmatprep.subr.bf16.mxu0 0
        %580 = vmatpush1.bf16.msra.mxu0 0
        %581 = vmatprep.mubr.bf16.mxu0 0
        %582 = vmatmul.mubr.bf16.gmra.mrb[0].mxu0 %v499
        %v583 = vpop.f32.mrb[0].mxu0
        %v584 = vadd.f32 0.0, %v583
        %v585 = vpop.f32.mrb[0].mxu0
        %v586 = vpop.f32.mrb[0].mxu0
        %v587 = vadd.f32 0.0, %v586
        %v588 = vpop.f32.mrb[0].mxu0
        %589 = vdwg.mxu0
        %v590 = vadd.f32 %v473, %v584
        %v591 = vadd.f32 %v474, %v587
        %v592 = vmax.f32 %v590, 0.0
        %v593 = vmax.f32 %v591, 0.0
        %594 = vst [vmem:[%s210] sm:$0xff] %v592
        %595 = vst [vmem:[%s210 + $0x8] sm:$0xff] %v593
        %s596 = sand.u32 %s118, 1
        %s597 = scalar_lea.sflag [#allocation4], %s596
        %s598 = sand.u32 %s118, 1
        %s599 = smul.addr %s598, 16
        %s600 = scalar_lea.vmem [#allocation5], %s599
        // Predicated region
        $region37: #{tpu_custom_call.1} parent=31 // pred_check
          %p601 = pneg %p128
        $region38: #{tpu_custom_call.1} parent=31 // pred_check_branch
          %603 = sbr.rel (%p601) target = $region40
        $region39: #{tpu_custom_call.1} parent=31 // pred_region
          %s605 = ssub.s32 256, 256
          %606 = vsyncadd %s597, %s605
          %s607 = smul.addr %s23, 2
          %s608 = sadd.s32 %s22, %s607
          %s609 = smul.addr %s608, 128
          %s610 = scalar_lea.hbm %s3, %s609
          %s611 = sshll.u32 %s600, 4
          %s612 = int_to_ptr.vmem [resolvable:$true] %s611
          %617 = dma.vmem_to_hbm [thread:$0]  %s612, 256, %s610, %s597, 128, 128, 8
        $region40: #{tpu_custom_call.1} parent=31 // pred_fallthru
          _
      $region32: #{tpu_custom_call.1} parent=5 // pred_fallthru
        _
      %p618 = scmp.le.s32.totalorder 2, %s13
      // Predicated region
      $region41: #{tpu_custom_call.1} parent=5 // pred_check
        %p619 = pneg %p618
      $region42: #{tpu_custom_call.1} parent=5 // pred_check_branch
        %621 = sbr.rel (%p619) target = $region44
      $region43: #{tpu_custom_call.1} parent=5 // pred_region
        %s622 = ssub.s32 %s13, 2
        // Predicated region
        $region45: #{tpu_custom_call.1} parent=43 // pred_check
          %p623 = pneg %p134
        $region46: #{tpu_custom_call.1} parent=43 // pred_check_branch
          %625 = sbr.rel (%p623) target = $region48
        $region47: #{tpu_custom_call.1} parent=43 // pred_region
          %s626 = sand.u32 %s119, 1
          %s627 = scalar_lea.sflag [#allocation4], %s626
          %s628 = sand.u32 %s119, 1
          %s629 = smul.addr %s628, 16
          %s630 = scalar_lea.vmem [#allocation5], %s629
          %631 = dma.done %s627, 256
        $region48: #{tpu_custom_call.1} parent=43 // pred_fallthru
          _
      $region44: #{tpu_custom_call.1} parent=5 // pred_fallthru
        _
    $region6: #{tpu_custom_call.1} parent=1 // loop_footer
      %s17 = sadd.s32 1, %s13
    $region7: #{tpu_custom_call.1} parent=1 // loop_footer_branch
      %12 = sbr.rel target = $region3
    $region8: #{tpu_custom_call.1} parent=1 // loop_exit
      _
    %632 = vsyncpa [#allocation3], 1
    %s633 = scalar_lea.sflag [#allocation3], 1
    %634 = vsyncpa %s633, 1
    %635 = vsyncpa [#allocation4], 1
    %s636 = scalar_lea.sflag [#allocation4], 1
    %637 = vsyncpa %s636, 1

</llo_original>
